<compile_context>
chip_gen: v5e
topology: v5e:2x2
jax: 0.10.0
libtpu: 0.0.40
codegen_flags: <defaults>
</compile_context>

<pallas_src>
import functools

import jax
import jax.numpy as jnp
from jax import lax
from jax.experimental import pallas as pl
from jax.experimental.pallas import tpu as pltpu


def _pe_dropout_kernel(seed_ref, x_ref, pe_ref, o_ref, *, p, training, n_cols, tb, tc):
    """One grid step = one (row-tile, col-tile) block of the flattened (B, S*D) slab.

    x_ref, o_ref: (TB, TC) VMEM tiles.  pe_ref: (1, TC) VMEM tile (broadcast over rows).
    seed_ref: (1,) int32 in SMEM (scalar prefetch).
    """
    y = x_ref[...] + pe_ref[...]  # (TB, TC) + (1, TC) broadcast over sublanes

    if training and p > 0.0:
        if p >= 1.0:
            y = jnp.zeros_like(y)
        else:
            c_tile = pl.program_id(0)
            r_tile = pl.program_id(1)
            row0 = (r_tile * tb).astype(jnp.uint32)
            col0 = (c_tile * tc).astype(jnp.uint32)
            rows = lax.broadcasted_iota(jnp.uint32, y.shape, 0) + row0
            cols = lax.broadcasted_iota(jnp.uint32, y.shape, 1) + col0
            # global element index -> unique per element across every grid tile
            idx = rows * jnp.uint32(n_cols) + cols
            seed = seed_ref[0].astype(jnp.uint32)
            z = idx ^ (seed * jnp.uint32(0x9E3779B9))
            # splitmix32-style finalizer (cheap uint32 VPU ops)
            z = (z ^ (z >> 16)) * jnp.uint32(0x7FEB352D)
            z = (z ^ (z >> 15)) * jnp.uint32(0x846CA68B)
            bits = z ^ (z >> 16)
            # clamp so p close to 1.0 never overflows uint32
            threshold = jnp.uint32(min(int(p * 4294967296.0), 4294967295))
            keep = (bits >= threshold).astype(y.dtype)
            scale = jnp.asarray(1.0 / (1.0 - p), dtype=y.dtype)
            y = y * (keep * scale)  # single fused multiply, no where/zeros

    o_ref[...] = y


def _pick_tile(dim, unit, target):
    """Largest multiple of `unit` that divides `dim` and is <= target; else full dim."""
    if dim % unit != 0:
        return dim  # full extent is always a legal block dim
    cap = min(dim, target)
    t = cap - (cap % unit)
    while t >= unit:
        if dim % t == 0:
            return t
        t -= unit
    return unit


def positional_encoding_forward(x, pe, *, p=0.1, training=False, seed=0):
    """x: (B, S, D); pe: (1, max_len, D). Returns (B, S, D) = dropout(x + pe[:, :S])."""
    B, S, D = x.shape
    N = S * D

    # Lane-dense 2D layout; pe cast to activation dtype (halves pe DMA for bf16).
    x_flat = x.reshape(B, N)
    pe_flat = pe[:, :S, :].astype(x.dtype).reshape(1, N)
    seed_arr = jnp.array([seed], dtype=jnp.int32)

    # Tiles: rows in multiples of 8 (or full B), cols in multiples of 128 (or full N).
    # TB=8, TC<=32768 f32 keeps (x + out double-buffered + resident pe) around ~4 MiB,
    # comfortably inside the default scoped VMEM limit on v5e/v6e/v7x.
    TB = _pick_tile(B, 8, 8)
    TC = _pick_tile(N, 128, 32768)
    grid = (N // TC, B // TB)  # col-tile OUTER, row-tile inner -> pe tile reused across batch

    kernel = functools.partial(
        _pe_dropout_kernel,
        p=float(p), training=bool(training), n_cols=N, tb=TB, tc=TC,
    )

    grid_spec = pltpu.PrefetchScalarGridSpec(
        num_scalar_prefetch=1,
        grid=grid,
        in_specs=[
            pl.BlockSpec((TB, TC), lambda c, r, seed: (r, c)),  # x tile
            pl.BlockSpec((1, TC), lambda c, r, seed: (0, c)),   # pe tile (row-broadcast)
        ],
        out_specs=pl.BlockSpec((TB, TC), lambda c, r, seed: (r, c)),
    )

    out_flat = pl.pallas_call(
        kernel,
        out_shape=jax.ShapeDtypeStruct((B, N), x.dtype),
        grid_spec=grid_spec,
        compiler_params=pltpu.CompilerParams(
            dimension_semantics=("parallel", "parallel"),
        ),
    )(seed_arr, x_flat, pe_flat)

    return out_flat.reshape(B, S, D)


def make_positional_encoding_buffer(d_model, max_len=5000, dtype=jnp.float32):
    """Deterministic pe buffer, identical formula to the PyTorch __init__."""
    position = jnp.arange(max_len, dtype=jnp.float32)[:, None]             # (max_len, 1)
    div_term = jnp.exp(
        jnp.arange(0, d_model, 2, dtype=jnp.float32) * (-jnp.log(10000.0) / d_model)
    )                                                                      # (d_model/2,)
    ang = position * div_term                                              # (max_len, d/2)
    # interleave sin/cos -> pe[:, 0::2] = sin, pe[:, 1::2] = cos
    pe = jnp.stack([jnp.sin(ang), jnp.cos(ang)], axis=-1).reshape(max_len, d_model)
    return pe[None, :, :].astype(dtype)                                    # (1, max_len, d)


if __name__ == "__main__":
    B, S, D = 2, 8, 32
    max_len = 64

    key = jax.random.PRNGKey(0)
    x = jax.random.normal(key, (B, S, D), dtype=jnp.float32)
    pe = make_positional_encoding_buffer(D, max_len=max_len)

    # Eval-mode forward (dropout is identity) -- deterministic, checkable.
    out_eval = positional_encoding_forward(x, pe, p=0.1, training=False)
    out_eval = jax.block_until_ready(out_eval)

    ref = x + pe[:, :S, :]
    assert jnp.allclose(out_eval, ref, atol=1e-6), "mismatch vs reference"

    # Training-mode forward (in-kernel hash-PRNG dropout) -- runs everywhere.
    out_train = positional_encoding_forward(x, pe, p=0.1, training=True, seed=123)
    out_train = jax.block_until_ready(out_train)
    assert out_train.shape == (B, S, D)

    print("KERNEL_OK")
</pallas_src>

<mosaic_0001>
module attributes {stable_mosaic.version = 11 : i64} {
  func.func @_pe_dropout_kernel(%arg0: i32, %arg1: i32, %arg2: memref<1xi32, #tpu.memory_space<smem>>, %arg3: memref<2x256xf32, #tpu.memory_space<vmem>>, %arg4: memref<1x256xf32, #tpu.memory_space<vmem>>, %arg5: memref<2x256xf32, #tpu.memory_space<vmem>>) attributes {dimension_semantics = [#tpu.dimension_semantics<parallel>, #tpu.dimension_semantics<parallel>], iteration_bounds = array<i64: 1, 1>, scalar_prefetch = 1 : i64, scratch_operands = 0 : i64, tpu.core_type = #tpu.core_type<tc>, window_params = [{transform_indices = @transform_0, window_bounds = array<i64: 2, 256>}, {transform_indices = @transform_1, window_bounds = array<i64: 1, 256>}, {transform_indices = @transform_2, window_bounds = array<i64: 2, 256>}]} {
    %c0 = arith.constant 0 : index
    %c0_0 = arith.constant 0 : index
    %0 = vector.load %arg3[%c0, %c0_0] : memref<2x256xf32, #tpu.memory_space<vmem>>, vector<2x256xf32>
    %c0_1 = arith.constant 0 : index
    %c0_2 = arith.constant 0 : index
    %1 = vector.load %arg4[%c0_1, %c0_2] : memref<1x256xf32, #tpu.memory_space<vmem>>, vector<1x256xf32>
    %2 = vector.broadcast %1 : vector<1x256xf32> to vector<2x256xf32>
    %3 = arith.addf %0, %2 : vector<2x256xf32>
    %c0_3 = arith.constant 0 : index
    %c0_4 = arith.constant 0 : index
    %4 = vector.load %arg5[%c0_3, %c0_4] : memref<2x256xf32, #tpu.memory_space<vmem>>, vector<2x256xf32>
    tpu.vector_store %arg5[%c0_3, %c0_4], %3 {strides = array<i32>} : memref<2x256xf32, #tpu.memory_space<vmem>>, vector<2x256xf32>,
    return
  }
  func.func @transform_0(%arg0: i32, %arg1: i32, %arg2: memref<1xi32, #tpu.memory_space<smem>>) -> (i32, i32) {
    %c0_i32 = arith.constant 0 : i32
    return %arg1, %arg0 : i32, i32
  }
  func.func @transform_1(%arg0: i32, %arg1: i32, %arg2: memref<1xi32, #tpu.memory_space<smem>>) -> (i32, i32) {
    %c0_i32 = arith.constant 0 : i32
    %c0_i32_0 = arith.constant 0 : i32
    return %c0_i32, %arg0 : i32, i32
  }
  func.func @transform_2(%arg0: i32, %arg1: i32, %arg2: memref<1xi32, #tpu.memory_space<smem>>) -> (i32, i32) {
    %c0_i32 = arith.constant 0 : i32
    return %arg1, %arg0 : i32, i32
  }
}

</mosaic_0001>

<llo_original>
// kernel: tpu_custom_call.1
$region0: #{tpu_custom_call.1}
  #allocation0 [shape = 'u32[]', space=smem, size = 0x4, offset = 0x4, fixed_abs, tag = 'smem constant byte address 0x4 - core index']
  #allocation1 [shape = 'u32[72,128]{1,0:T(1,128)}', space=vmem, size = 0x9000, scoped, tag = 'internal scratch']
  #allocation2 [shape = 's32[1]{0}', space=sflag, size = 0x4, scoped, tag = 'scoped memory for tpu_custom_call.1']
  #allocation3 [shape = 's32[1]{0:T(128)S(6)}', space=smem, size = 0x200, scoped, tag = 'prefetched SMEM operand 0']
  %s0 = inlined_call_operand.<no memory space> [shape: s32[1], index: 0, kind: input, shape index: {}]
  %s1 = inlined_call_operand.hbm [shape: f32[2,256], index: 1, kind: input, shape index: {}]
  %s2 = inlined_call_operand.vmem [shape: f32[1,256], index: 2, kind: input, shape index: {}]
  %s3 = inlined_call_operand.hbm [shape: f32[2,256], index: 3, kind: output, shape index: {}]
  %s4 = sld [smem:[#allocation0]]
  $region22: #{tpu_custom_call.1} parent=0
    _
  %s6 = ssub.s32 1, %s4
  %s7 = scalar_select 0, %s6, %s4
  %8 = sst [smem:[#allocation3]] %s0
  $region1: #{tpu_custom_call.1} parent=0
    #allocation4 [shape = 'u8[2048]{0}', space=vmem, size = 0x800, scoped, tag = 'input window, operand 1, single buffered']
    #allocation5 [shape = 's32[1]{0}', space=sflag, size = 0x4, scoped, tag = 'scoped memory for tpu_custom_call.1']
    #allocation6 [shape = 's32[1]{0}', space=sflag, size = 0x4, scoped, tag = 'scoped memory for tpu_custom_call.1']
    #allocation7 [shape = 'u8[2048]{0}', space=vmem, size = 0x800, scoped, tag = 'output window, operand 0, single buffered']
    %9 = vsyncpa [#allocation5], 0
    %10 = vsyncpa [#allocation6], 0
    // Predicated region
    $region2: #{tpu_custom_call.1} parent=1 // pred_check
      _
    $region3: #{tpu_custom_call.1} parent=1 // pred_check_branch
      %12 = sbr.rel (0) target = $region5
    $region4: #{tpu_custom_call.1} parent=1 // pred_region
      %14 = vsyncadd [#allocation5], 0
      %s16 = sshll.u32 %s1, 4
      %s17 = int_to_ptr.hbm [resolvable:$true] %s16
      %s18 = sshll.u32 [#allocation4], 4
      %s19 = int_to_ptr.vmem [resolvable:$true] %s18
      %21 = dma.hbm_to_vmem [thread:$0]  %s17, 64, %s19, [#allocation5]
    $region5: #{tpu_custom_call.1} parent=1 // pred_fallthru
      _
    // Predicated region
    $region6: #{tpu_custom_call.1} parent=1 // pred_check
      _
    $region7: #{tpu_custom_call.1} parent=1 // pred_check_branch
      %23 = sbr.rel (0) target = $region9
    $region8: #{tpu_custom_call.1} parent=1 // pred_region
      _
    $region9: #{tpu_custom_call.1} parent=1 // pred_fallthru
      _
    // Predicated region
    $region10: #{tpu_custom_call.1} parent=1 // pred_check
      _
    $region11: #{tpu_custom_call.1} parent=1 // pred_check_branch
      %25 = sbr.rel (0) target = $region13
    $region12: #{tpu_custom_call.1} parent=1 // pred_region
      %27 = dma.done [#allocation5], 64
    $region13: #{tpu_custom_call.1} parent=1 // pred_fallthru
      _
    %v28 = vld [vmem:[#allocation4] sm:$0xf]
    %v29 = vld [vmem:[%s2] sm:$0x3]
    %v31 = vperm.slane %v29, 0
    %v32 = vperm.slane %v29, 1
    %v33 = vrot.slane %v32, 6
    %vm34 = vcmask 1041408
    %v35 = vsel %vm34, %v31, %v33
    %v37 = vadd.f32 %v28, %v35
    %38 = vst [vmem:[#allocation7] sm:$0xf] %v37
    // Predicated region
    $region14: #{tpu_custom_call.1} parent=1 // pred_check
      _
    $region15: #{tpu_custom_call.1} parent=1 // pred_check_branch
      %40 = sbr.rel (0) target = $region17
    $region16: #{tpu_custom_call.1} parent=1 // pred_region
      %42 = vsyncadd [#allocation6], 0
      %s44 = sshll.u32 [#allocation7], 4
      %s45 = int_to_ptr.vmem [resolvable:$true] %s44
      %s46 = sshll.u32 %s3, 4
      %s47 = int_to_ptr.hbm [resolvable:$true] %s46
      %49 = dma.vmem_to_hbm [thread:$0]  %s45, 64, %s47, [#allocation6]
    $region17: #{tpu_custom_call.1} parent=1 // pred_fallthru
      _
    // Predicated region
    $region18: #{tpu_custom_call.1} parent=1 // pred_check
      _
    $region19: #{tpu_custom_call.1} parent=1 // pred_check_branch
      %51 = sbr.rel (0) target = $region21
    $region20: #{tpu_custom_call.1} parent=1 // pred_region
      %53 = dma.done [#allocation6], 64
    $region21: #{tpu_custom_call.1} parent=1 // pred_fallthru
      _
    %54 = vsyncpa [#allocation5], 1
    %55 = vsyncpa [#allocation6], 1

</llo_original>
